<compile_context>
chip_gen: v7x
topology: tpu7x:2x2x1
jax: 0.10.0
libtpu: 0.0.40
codegen_flags: <defaults>
</compile_context>

<pallas_src>
import functools

import jax
import jax.numpy as jnp
import numpy as np
from jax import lax
from jax.experimental import pallas as pl
from jax.experimental.pallas import tpu as pltpu


def _round_up(n, m):
    return ((n + m - 1) // m) * m


def _gpu_layer_kernel(t_ref, rho_ref, out_ref, *, lambd, n_real):
    # t_ref:   (TB, P_pad) ascending-sorted values of rho*x, padded with a large
    #          sentinel beyond lane n_real.
    # rho_ref: (TB, P_pad) rho permuted by the same argsort, padded with 1.0.
    t = t_ref[...].astype(jnp.float32)
    rho = rho_ref[...].astype(jnp.float32)
    TB, P = t.shape

    # Upper-triangular ones mask generated in-kernel (no HBM "A" matrix).
    row = lax.broadcasted_iota(jnp.int32, (P, P), 0)
    col = lax.broadcasted_iota(jnp.int32, (P, P), 1)
    tri = (row <= col).astype(jnp.float32)

    # Prefix sums T[b, l] = sum_{i<=l} t[b, i] on the MXU (mirrors cp.matmul(., A)).
    T = jnp.dot(t, tri, preferred_element_type=jnp.float32)

    lane = lax.broadcasted_iota(jnp.int32, (TB, P), 1)  # 0-based position
    lane_f = lane.astype(jnp.float32)

    # Pool-adjacent-violators stopping rule (exact QP solution):
    #   k* = min { k >= 1 : T_k + lambd <= k * t_{k+1} }   (t_{P+1} = +inf)
    # Evaluated at lane l (checking k = l):  T_l - t_l is the prefix sum of the
    # first l elements.  Padded lanes (l >= n_real) are forced "ok" so that the
    # default kidx = n_real - 1 (i.e. k* = P_real) is reproduced exactly,
    # independent of the pad sentinel values.
    ok = (lane >= 1) & ((T - t + lambd) <= lane_f * t)
    ok = ok | (lane >= n_real)
    kidx = jnp.min(jnp.where(ok, lane - 1, P - 1), axis=-1, keepdims=True)

    # Prefix sum T_{k*} extracted by a masked reduction (no dynamic gather).
    T_k = jnp.sum(jnp.where(lane == kidx, T, 0.0), axis=-1, keepdims=True)
    m = -(T_k + lambd) * pl.reciprocal(kidx.astype(jnp.float32) + 1.0, approx=False)
    pool_s = jnp.maximum(m, 0.0)

    # z = rho * answer (in sorted order):
    #   z_j = t_j + max(m, 0)  for j <= k*,     z_j = max(t_j, 0) otherwise.
    z = jnp.where(lane <= kidx, t + pool_s, jnp.maximum(t, 0.0))

    # Divide via EUP reciprocal (approx=False keeps numerics tight vs torch ref).
    out_ref[...] = z * pl.reciprocal(rho, approx=False)


def gpu_layer(x, rho, lambd, *, block_b=256):
    """Forward pass of GPU_layer.  x: (B, P) float32, rho: (P,) or (B, P) > 0."""
    B, P = x.shape
    x = x.astype(jnp.float32)
    rho_b = jnp.broadcast_to(jnp.asarray(rho, jnp.float32), (B, P))

    # sorted_args = argsort(x * rho); gather x*rho and rho into that order (glue).
    y = x * rho_b
    order = jnp.argsort(y, axis=-1)
    t = jnp.take_along_axis(y, order, axis=-1)             # ascending sort of rho*x
    rho_sorted = jnp.take_along_axis(rho_b, order, axis=-1)

    # Lane-dense padding (multiple of 128) + batch tiling (multiple of 8, <= block_b).
    P_pad = _round_up(P, 128)
    TB = min(block_b, _round_up(B, 8))
    B_pad = _round_up(B, TB)

    SENTINEL = 1.0e30  # keeps padded t "largest"; correctness does not rely on it
    t_p = jnp.pad(t, ((0, B_pad - B), (0, P_pad - P)), constant_values=SENTINEL)
    rho_p = jnp.pad(rho_sorted, ((0, B_pad - B), (0, P_pad - P)), constant_values=1.0)

    grid_b = B_pad // TB
    kernel = functools.partial(_gpu_layer_kernel, lambd=float(lambd), n_real=P)
    sol_sorted = pl.pallas_call(
        kernel,
        out_shape=jax.ShapeDtypeStruct((B_pad, P_pad), jnp.float32),
        grid=(grid_b,),
        in_specs=[
            pl.BlockSpec((TB, P_pad), lambda i: (i, 0)),
            pl.BlockSpec((TB, P_pad), lambda i: (i, 0)),
        ],
        out_specs=pl.BlockSpec((TB, P_pad), lambda i: (i, 0)),
        compiler_params=pltpu.CompilerParams(
            dimension_semantics=("parallel",),
            vmem_limit_bytes=32 * 1024 * 1024,
        ),
    )(t_p, rho_p)

    sol_sorted = sol_sorted[:B, :P]

    # Un-sort with a scatter (out[order[j]] = sol_sorted[j]); avoids a 2nd argsort.
    rows = jnp.arange(B)[:, None]
    return jnp.zeros((B, P), jnp.float32).at[rows, order].set(sol_sorted)


if __name__ == "__main__":
    B, P = 8, 16
    lambd = 0.5

    key = jax.random.PRNGKey(0)
    kx, kr = jax.random.split(key)
    x = jax.random.normal(kx, (B, P), dtype=jnp.float32)
    rho = jax.random.uniform(kr, (P,), dtype=jnp.float32, minval=0.5, maxval=1.5)

    fwd = jax.jit(functools.partial(gpu_layer, lambd=lambd))
    answer = fwd(x, rho)
    jax.block_until_ready(answer)

    # Independent KKT check of the QP solution (feasibility + dual structure).
    xo = np.asarray(x)
    rb = np.broadcast_to(np.asarray(rho), (B, P))
    sol = np.asarray(answer)
    y = xo * rb
    order = np.argsort(y, axis=-1)
    t = np.take_along_axis(y, order, axis=-1)
    rs = np.take_along_axis(rb, order, axis=-1)
    a_s = np.take_along_axis(sol, order, axis=-1)
    z = rs * a_s
    s = z - t
    prefix = np.cumsum(z, axis=-1)
    tol = 1e-3
    assert np.all(prefix + lambd >= -tol), "constraint cumsum(z) >= -lambd violated"
    assert np.all(s >= -tol), "dual suffix sums must be nonnegative"
    assert np.all(np.diff(s, axis=-1) <= tol), "dual suffix sums must be nonincreasing"
    mu = np.concatenate([s[:, :-1] - s[:, 1:], s[:, -1:]], axis=-1)
    assert not np.any((mu > 1e-2) & (np.abs(prefix + lambd) > 1e-2)), "comp. slackness"

    print("KERNEL_OK")
</pallas_src>

<mosaic_0001>
module attributes {stable_mosaic.version = 11 : i64} {
  func.func @_gpu_layer_kernel(%arg0: i32, %arg1: memref<8x128xf32, #tpu.memory_space<vmem>>, %arg2: memref<8x128xf32, #tpu.memory_space<vmem>>, %arg3: memref<8x128xf32, #tpu.memory_space<vmem>>) attributes {dimension_semantics = [#tpu.dimension_semantics<parallel>], iteration_bounds = array<i64: 1>, scalar_prefetch = 0 : i64, scratch_operands = 0 : i64, tpu.core_type = #tpu.core_type<tc>, window_params = [{transform_indices = @transform_0, window_bounds = array<i64: 8, 128>}, {transform_indices = @transform_1, window_bounds = array<i64: 8, 128>}, {transform_indices = @transform_2, window_bounds = array<i64: 8, 128>}]} {
    %c0 = arith.constant 0 : index
    %c0_0 = arith.constant 0 : index
    %0 = vector.load %arg1[%c0, %c0_0] : memref<8x128xf32, #tpu.memory_space<vmem>>, vector<8x128xf32>
    %c0_1 = arith.constant 0 : index
    %c0_2 = arith.constant 0 : index
    %1 = vector.load %arg2[%c0_1, %c0_2] : memref<8x128xf32, #tpu.memory_space<vmem>>, vector<8x128xf32>
    %2 = tpu.iota {dimensions = array<i32: 0>} : vector<128x128xi32>
    %3 = tpu.iota {dimensions = array<i32: 1>} : vector<128x128xi32>
    %4 = arith.cmpi sle, %2, %3 : vector<128x128xi32>
    %5 = arith.extui %4 : vector<128x128xi1> to vector<128x128xi32>
    %6 = arith.sitofp %5 : vector<128x128xi32> to vector<128x128xf32>
    %cst = arith.constant dense<0.000000e+00> : vector<8x128xf32>
    %7 = tpu.matmul %0, %6, %cst {dimension_numbers = #tpu.dot_dimension_numbers<[1], [0], [0], [1], [0, 0, 1, 1], [], []>} : vector<8x128xf32>, vector<128x128xf32>, vector<8x128xf32> -> vector<8x128xf32>
    %8 = tpu.iota {dimensions = array<i32: 1>} : vector<8x128xi32>
    %9 = arith.sitofp %8 : vector<8x128xi32> to vector<8x128xf32>
    %c1_i32 = arith.constant 1 : i32
    %10 = vector.broadcast %c1_i32 : i32 to vector<8x128xi32>
    %11 = arith.cmpi sge, %8, %10 : vector<8x128xi32>
    %12 = arith.subf %7, %0 : vector<8x128xf32>
    %cst_3 = arith.constant 5.000000e-01 : f32
    %13 = vector.broadcast %cst_3 : f32 to vector<8x128xf32>
    %14 = arith.addf %12, %13 : vector<8x128xf32>
    %15 = arith.mulf %9, %0 : vector<8x128xf32>
    %16 = arith.cmpf ole, %14, %15 : vector<8x128xf32>
    %17 = arith.andi %11, %16 : vector<8x128xi1>
    %c16_i32 = arith.constant 16 : i32
    %18 = vector.broadcast %c16_i32 : i32 to vector<8x128xi32>
    %19 = arith.cmpi sge, %8, %18 : vector<8x128xi32>
    %20 = arith.ori %17, %19 : vector<8x128xi1>
    %c1_i32_4 = arith.constant 1 : i32
    %21 = vector.broadcast %c1_i32_4 : i32 to vector<8x128xi32>
    %22 = arith.subi %8, %21 : vector<8x128xi32>
    %c127_i32 = arith.constant 127 : i32
    %23 = vector.broadcast %c127_i32 : i32 to vector<8x128xi32>
    %24 = arith.select %20, %22, %23 : vector<8x128xi1>, vector<8x128xi32>
    %cst_5 = arith.constant dense<2147483647> : vector<8xi32>
    %25 = vector.multi_reduction <minsi>, %24, %cst_5 [1] : vector<8x128xi32> to vector<8xi32>
    %26 = vector.shape_cast %25 : vector<8xi32> to vector<8x1xi32>
    %27 = vector.broadcast %26 : vector<8x1xi32> to vector<8x128xi32>
    %28 = arith.cmpi eq, %8, %27 : vector<8x128xi32>
    %cst_6 = arith.constant 0.000000e+00 : f32
    %29 = vector.broadcast %cst_6 : f32 to vector<8x128xf32>
    %30 = arith.select %28, %7, %29 : vector<8x128xi1>, vector<8x128xf32>
    %cst_7 = arith.constant dense<0.000000e+00> : vector<8xf32>
    %31 = vector.multi_reduction <add>, %30, %cst_7 [1] : vector<8x128xf32> to vector<8xf32>
    %32 = vector.shape_cast %31 : vector<8xf32> to vector<8x1xf32>
    %cst_8 = arith.constant 5.000000e-01 : f32
    %33 = vector.broadcast %cst_8 : f32 to vector<8x1xf32>
    %34 = arith.addf %32, %33 : vector<8x1xf32>
    %cst_9 = arith.constant 0.000000e+00 : f32
    %35 = vector.broadcast %cst_9 : f32 to vector<8x1xf32>
    %36 = arith.subf %35, %34 : vector<8x1xf32>
    %37 = arith.sitofp %26 : vector<8x1xi32> to vector<8x1xf32>
    %cst_10 = arith.constant 1.000000e+00 : f32
    %38 = vector.broadcast %cst_10 : f32 to vector<8x1xf32>
    %39 = arith.addf %37, %38 : vector<8x1xf32>
    %40 = tpu.reciprocal %39 : vector<8x1xf32> -> vector<8x1xf32>
    %41 = arith.mulf %36, %40 : vector<8x1xf32>
    %cst_11 = arith.constant 0.000000e+00 : f32
    %42 = vector.broadcast %cst_11 : f32 to vector<8x1xf32>
    %43 = arith.maximumf %41, %42 : vector<8x1xf32>
    %44 = vector.broadcast %26 : vector<8x1xi32> to vector<8x128xi32>
    %45 = arith.cmpi sle, %8, %44 : vector<8x128xi32>
    %46 = vector.broadcast %43 : vector<8x1xf32> to vector<8x128xf32>
    %47 = arith.addf %0, %46 : vector<8x128xf32>
    %cst_12 = arith.constant 0.000000e+00 : f32
    %48 = vector.broadcast %cst_12 : f32 to vector<8x128xf32>
    %49 = arith.maximumf %0, %48 : vector<8x128xf32>
    %50 = arith.select %45, %47, %49 : vector<8x128xi1>, vector<8x128xf32>
    %51 = tpu.reciprocal %1 : vector<8x128xf32> -> vector<8x128xf32>
    %52 = arith.mulf %50, %51 : vector<8x128xf32>
    %c0_13 = arith.constant 0 : index
    %c0_14 = arith.constant 0 : index
    %53 = vector.load %arg3[%c0_13, %c0_14] : memref<8x128xf32, #tpu.memory_space<vmem>>, vector<8x128xf32>
    tpu.vector_store %arg3[%c0_13, %c0_14], %52 {strides = array<i32>} : memref<8x128xf32, #tpu.memory_space<vmem>>, vector<8x128xf32>,
    return
  }
  func.func @transform_0(%arg0: i32) -> (i32, i32) {
    %c0_i32 = arith.constant 0 : i32
    %c0_i32_0 = arith.constant 0 : i32
    return %arg0, %c0_i32 : i32, i32
  }
  func.func @transform_1(%arg0: i32) -> (i32, i32) {
    %c0_i32 = arith.constant 0 : i32
    %c0_i32_0 = arith.constant 0 : i32
    return %arg0, %c0_i32 : i32, i32
  }
  func.func @transform_2(%arg0: i32) -> (i32, i32) {
    %c0_i32 = arith.constant 0 : i32
    %c0_i32_0 = arith.constant 0 : i32
    return %arg0, %c0_i32 : i32, i32
  }
}

</mosaic_0001>

<llo_original>
// kernel: gpu_layer.1
$region0: #{gpu_layer.1}
  #allocation0 [shape = 'u32[]', space=smem, size = 0x4, offset = 0x4, fixed_abs, tag = 'smem constant byte address 0x4 - core index']
  #allocation1 [shape = 'u32[144,128]{1,0:T(1,128)}', space=vmem, size = 0x12000, scoped, tag = 'internal scratch']
  %s0 = inlined_call_operand.vmem [shape: f32[8,128], index: 0, kind: input, shape index: {}]
  %s1 = inlined_call_operand.vmem [shape: f32[8,128], index: 1, kind: input, shape index: {}]
  %s2 = inlined_call_operand.vmem [shape: f32[8,128], index: 2, kind: output, shape index: {}]
  %s3 = sld [smem:[#allocation0]]
  $region18: #{gpu_layer.1} parent=0
    _
  %s5 = ssub.s32 1, %s3
  %s6 = scalar_select 0, %s5, %s3
  // Predicated region
  $region2: #{gpu_layer.1} parent=0 // pred_check
    _
  $region3: #{gpu_layer.1} parent=0 // pred_check_branch
    %8 = sbr.rel (0) target = $region5
  $region4: #{gpu_layer.1} parent=0 // pred_region
    _
  $region5: #{gpu_layer.1} parent=0 // pred_fallthru
    _
  // Predicated region
  $region6: #{gpu_layer.1} parent=0 // pred_check
    _
  $region7: #{gpu_layer.1} parent=0 // pred_check_branch
    %10 = sbr.rel (0) target = $region9
  $region8: #{gpu_layer.1} parent=0 // pred_region
    _
  $region9: #{gpu_layer.1} parent=0 // pred_fallthru
    _
  %v11 = vld [vmem:[%s0] sm:$0xff]
  %v12 = vld [vmem:[%s1] sm:$0xff]
  %v13 = vlaneseq
  %v14 = vshrl.u32 %v13, 7
  %v15 = vadd.s32 %v14, 8
  %v16 = vadd.s32 %v14, 16
  %v17 = vadd.s32 %v14, 24
  %v18 = vadd.s32 %v14, 32
  %v19 = vadd.s32 %v14, 40
  %v20 = vadd.s32 %v14, 48
  %v21 = vadd.s32 %v14, 56
  %v22 = vadd.s32 %v14, 64
  %v23 = vadd.s32 %v14, 72
  %v24 = vadd.s32 %v14, 80
  %v25 = vadd.s32 %v14, 88
  %v26 = vadd.s32 %v14, 96
  %v27 = vadd.s32 %v14, 104
  %v28 = vadd.s32 %v14, 112
  %v29 = vadd.s32 %v14, 120
  %v30 = vlaneseq
  %v31 = vand.u32 %v30, 127
  %vm32 = vcmp.le.s32.totalorder %v14, %v31
  %vm33 = vcmp.le.s32.totalorder %v15, %v31
  %vm34 = vcmp.le.s32.totalorder %v16, %v31
  %vm35 = vcmp.le.s32.totalorder %v17, %v31
  %vm36 = vcmp.le.s32.totalorder %v18, %v31
  %vm37 = vcmp.le.s32.totalorder %v19, %v31
  %vm38 = vcmp.le.s32.totalorder %v20, %v31
  %vm39 = vcmp.le.s32.totalorder %v21, %v31
  %vm40 = vcmp.le.s32.totalorder %v22, %v31
  %vm41 = vcmp.le.s32.totalorder %v23, %v31
  %vm42 = vcmp.le.s32.totalorder %v24, %v31
  %vm43 = vcmp.le.s32.totalorder %v25, %v31
  %vm44 = vcmp.le.s32.totalorder %v26, %v31
  %vm45 = vcmp.le.s32.totalorder %v27, %v31
  %vm46 = vcmp.le.s32.totalorder %v28, %v31
  %vm47 = vcmp.le.s32.totalorder %v29, %v31
  %v48 = vsel %vm32, 1, 0
  %v49 = vsel %vm33, 1, 0
  %v50 = vsel %vm34, 1, 0
  %v51 = vsel %vm35, 1, 0
  %v52 = vsel %vm36, 1, 0
  %v53 = vsel %vm37, 1, 0
  %v54 = vsel %vm38, 1, 0
  %v55 = vsel %vm39, 1, 0
  %v56 = vsel %vm40, 1, 0
  %v57 = vsel %vm41, 1, 0
  %v58 = vsel %vm42, 1, 0
  %v59 = vsel %vm43, 1, 0
  %v60 = vsel %vm44, 1, 0
  %v61 = vsel %vm45, 1, 0
  %v62 = vsel %vm46, 1, 0
  %v63 = vsel %vm47, 1, 0
  %v64 = vcvt.s32.f32 %v48
  %v65 = vcvt.s32.f32 %v49
  %v66 = vcvt.s32.f32 %v50
  %v67 = vcvt.s32.f32 %v51
  %v68 = vcvt.s32.f32 %v52
  %v69 = vcvt.s32.f32 %v53
  %v70 = vcvt.s32.f32 %v54
  %v71 = vcvt.s32.f32 %v55
  %v72 = vcvt.s32.f32 %v56
  %v73 = vcvt.s32.f32 %v57
  %v74 = vcvt.s32.f32 %v58
  %v75 = vcvt.s32.f32 %v59
  %v76 = vcvt.s32.f32 %v60
  %v77 = vcvt.s32.f32 %v61
  %v78 = vcvt.s32.f32 %v62
  %v79 = vcvt.s32.f32 %v63
  %80 = vmatprep.subr.mxu0 0.0
  %81 = vmatpush1.msra.mxu0 %v64
  %82 = vmatprep.subr.mxu0 0.0
  %83 = vmatpush1.msra.mxu0 %v65
  %84 = vmatprep.subr.mxu0 0.0
  %85 = vmatpush1.msra.mxu0 %v66
  %86 = vmatprep.subr.mxu0 0.0
  %87 = vmatpush1.msra.mxu0 %v67
  %88 = vmatprep.subr.mxu0 0.0
  %89 = vmatpush1.msra.mxu0 %v68
  %90 = vmatprep.subr.mxu0 0.0
  %91 = vmatpush1.msra.mxu0 %v69
  %92 = vmatprep.subr.mxu0 0.0
  %93 = vmatpush1.msra.mxu0 %v70
  %94 = vmatprep.subr.mxu0 0.0
  %95 = vmatpush1.msra.mxu0 %v71
  %96 = vmatprep.subr.mxu0 0.0
  %97 = vmatpush1.msra.mxu0 %v72
  %98 = vmatprep.subr.mxu0 0.0
  %99 = vmatpush1.msra.mxu0 %v73
  %100 = vmatprep.subr.mxu0 0.0
  %101 = vmatpush1.msra.mxu0 %v74
  %102 = vmatprep.subr.mxu0 0.0
  %103 = vmatpush1.msra.mxu0 %v75
  %104 = vmatprep.subr.mxu0 0.0
  %105 = vmatpush1.msra.mxu0 %v76
  %106 = vmatprep.subr.mxu0 0.0
  %107 = vmatpush1.msra.mxu0 %v77
  %108 = vmatprep.subr.mxu0 0.0
  %109 = vmatpush1.msra.mxu0 %v78
  %110 = vmatprep.subr.mxu0 0.0
  %111 = vmatpush1.msra.mxu0 %v79
  %112 = vmatprep.subr.mxu0 0.0
  %113 = vmatpush1.msra.mxu0 0.0
  %114 = vmatprep.subr.mxu0 0.0
  %115 = vmatpush1.msra.mxu0 0.0
  %116 = vmatprep.subr.mxu0 0.0
  %117 = vmatpush1.msra.mxu0 0.0
  %118 = vmatprep.subr.mxu0 0.0
  %119 = vmatpush1.msra.mxu0 0.0
  %120 = vmatprep.subr.mxu0 0.0
  %121 = vmatpush1.msra.mxu0 0.0
  %122 = vmatprep.subr.mxu0 0.0
  %123 = vmatpush1.msra.mxu0 0.0
  %124 = vmatprep.subr.mxu0 0.0
  %125 = vmatpush1.msra.mxu0 0.0
  %126 = vmatprep.subr.mxu0 0.0
  %127 = vmatpush1.msra.mxu0 0.0
  %128 = vmatprep.subr.mxu0 0.0
  %129 = vmatpush1.msra.mxu0 0.0
  %130 = vmatprep.subr.mxu0 0.0
  %131 = vmatpush1.msra.mxu0 0.0
  %132 = vmatprep.subr.mxu0 0.0
  %133 = vmatpush1.msra.mxu0 0.0
  %134 = vmatprep.subr.mxu0 0.0
  %135 = vmatpush1.msra.mxu0 0.0
  %136 = vmatprep.subr.mxu0 0.0
  %137 = vmatpush1.msra.mxu0 0.0
  %138 = vmatprep.subr.mxu0 0.0
  %139 = vmatpush1.msra.mxu0 0.0
  %140 = vmatprep.subr.mxu0 0.0
  %141 = vmatpush1.msra.mxu0 0.0
  %142 = vmatprep.subr.mxu0 0.0
  %143 = vmatpush1.msra.mxu0 0.0
  %144 = vmatprep.mubr.f32.mxu0 0.0
  %145 = vmatmul.mubr.f32.gmra.mrb[0].mxu0 %v11
  %v146 = vpop.f32.mrb[0].mxu0
  %v147 = vadd.f32 0.0, %v146
  %v148 = vpop.f32.mrb[0].mxu0
  %149 = vdwg.mxu0
  %v150 = vcvt.s32.f32 %v31
  %vm151 = vcmp.ge.s32.totalorder %v31, 1
  %v152 = vsub.f32 %v147, %v11
  %v153 = vadd.f32 %v152, 0.5
  %v154 = vmul.f32 %v150, %v11
  %vm155 = vcmp.le.f32.partialorder %v153, %v154
  %vm156 = vmand %vm151, %vm155
  %vm157 = vcmp.ge.s32.totalorder %v31, 16
  %vm158 = vmor %vm156, %vm157
  %v159 = vsub.s32 %v31, 1
  %v160 = vsel %vm158, %v159, 127
  %v161 = vand.u32 %v160, 65535
  %v162 = vshra.s32 %v160, 16
  %v163 = vcvt.s32.f32 %v161
  %v164 = vcvt.s32.f32 %v162
  %165 = vmin.xlane.f32.xlu0 %v164
  %v166 = vpop.xlane.xlu0 %165
  %vm167 = vcmp.eq.f32.partialorder %v164, %v166
  %v168 = vsel %vm167, %v163, inf
  %169 = vmin.xlane.f32.xlu0 %v168
  %v170 = vpop.xlane.xlu0 %169
  %v171 = vcvt.f32.s32 %v170
  %v172 = vcvt.f32.s32 %v166
  %v173 = vshll.u32 %v172, 16
  %v174 = vadd.s32 %v173, %v171
  %vm175 = vcmp.eq.s32.totalorder %v31, %v174
  %v176 = vsel %vm175, %v147, 0.0
  %177 = vadd.xlane.f32.xlu0 %v176
  %v178 = vpop.xlane.xlu0 %177
  %v179 = vadd.f32 %v178, 0.5
  %v180 = vsub.f32 0.0, %v179
  %v181 = vcvt.s32.f32 %v174
  %v182 = vadd.f32 %v181, 1.0
  %v183 = vrcp.pop %v182
  %v184 = vmul.f32 %v180, %v183
  %v185 = vmax.f32 %v184, 0.0
  %vm186 = vcmp.le.s32.totalorder %v31, %v174
  %v187 = vadd.f32 %v11, %v185
  %v188 = vmax.f32 %v11, 0.0
  %v189 = vsel %vm186, %v187, %v188
  %v190 = vrcp.pop %v12
  %v191 = vmul.f32 %v189, %v190
  %192 = vst [vmem:[%s2] sm:$0xff] %v191
  // Predicated region
  $region10: #{gpu_layer.1} parent=0 // pred_check
    _
  $region11: #{gpu_layer.1} parent=0 // pred_check_branch
    %194 = sbr.rel (0) target = $region13
  $region12: #{gpu_layer.1} parent=0 // pred_region
    _
  $region13: #{gpu_layer.1} parent=0 // pred_fallthru
    _
  // Predicated region
  $region14: #{gpu_layer.1} parent=0 // pred_check
    _
  $region15: #{gpu_layer.1} parent=0 // pred_check_branch
    %196 = sbr.rel (0) target = $region17
  $region16: #{gpu_layer.1} parent=0 // pred_region
    _
  $region17: #{gpu_layer.1} parent=0 // pred_fallthru
    _

</llo_original>
